<compile_context>
chip_gen: v6e
topology: v6e:2x2x1
jax: 0.10.0
libtpu: 0.0.40
codegen_flags: <defaults>
</compile_context>

<pallas_src>
import functools

import jax
import jax.numpy as jnp
from jax.experimental import pallas as pl
from jax.experimental.pallas import tpu as pltpu


def _round_up(x, m):
    return (x + m - 1) // m * m


def _pwp_kernel(x_ref, wu_ref, wd_ref, o_ref, acc_ref):
    # x_ref:   (tm, H)   token tile (native dtype)
    # wu_ref:  (H, ti)   up-projection weight slab   (pre-transposed)
    # wd_ref:  (ti, H)   down-projection weight slab (pre-transposed)
    # o_ref:   (tm, H)
    # acc_ref: (tm, H)   f32 accumulator, persistent across the I axis
    @pl.when(pl.program_id(1) == 0)
    def _():
        acc_ref[...] = jnp.zeros_like(acc_ref)

    # Up projection: native-dtype operands on the MXU, f32 accumulation.
    h = jnp.dot(x_ref[...], wu_ref[...], preferred_element_type=jnp.float32)
    # SiLU in f32 on the VPU/EUP (exact; elementwise in the I dimension).
    h = h * jax.nn.sigmoid(h)
    # Down projection of this I-chunk; cast activation to weight dtype so the
    # MXU sees matching (e.g. bf16 x bf16) operands, accumulate in f32.
    acc_ref[...] += jnp.dot(h.astype(wd_ref.dtype), wd_ref[...],
                            preferred_element_type=jnp.float32)

    @pl.when(pl.program_id(1) == pl.num_programs(1) - 1)
    def _():
        o_ref[...] = acc_ref[...].astype(o_ref.dtype)


@functools.partial(jax.jit, static_argnames=("tm", "ti"))
def point_wise_projection(x, w_up_t, w_down_t, *, tm=256, ti=512):
    """Forward pass of PointWiseProjection.

    x:        (B, S, H)
    w_up_t:   (H, I)  up-projection weight, already transposed from torch layout
    w_down_t: (I, H)  down-projection weight, already transposed from torch layout
    """
    B, S, H = x.shape
    Hw, I = w_up_t.shape
    assert Hw == H and w_down_t.shape == (I, H)

    M = B * S
    x2d = x.reshape(M, H)

    # Token tile: MXU-sized when M is big enough, otherwise the (8-aligned)
    # full token count so the sublane constraint is satisfied at small shapes.
    tm_eff = min(tm, _round_up(M, 8))
    Mp = _round_up(M, tm_eff)
    if Mp != M:
        x2d = jnp.pad(x2d, ((0, Mp - M), (0, 0)))

    # Intermediate tile: must evenly divide I (fall back to full I otherwise).
    ti_eff = min(ti, I)
    if I % ti_eff != 0:
        ti_eff = I  # TODO(synk): pad I with zero slabs for non-divisible I.

    grid = (Mp // tm_eff, I // ti_eff)

    itemsize_x = jnp.dtype(x.dtype).itemsize
    itemsize_w = jnp.dtype(w_up_t.dtype).itemsize
    cost = pl.CostEstimate(
        flops=4 * M * H * I,
        transcendentals=M * I,
        bytes_accessed=2 * M * H * itemsize_x + 2 * H * I * itemsize_w,
    )

    out = pl.pallas_call(
        _pwp_kernel,
        out_shape=jax.ShapeDtypeStruct((Mp, H), x.dtype),
        grid_spec=pltpu.PrefetchScalarGridSpec(
            num_scalar_prefetch=0,
            grid=grid,
            in_specs=[
                pl.BlockSpec((tm_eff, H), lambda i, j: (i, 0)),   # token tile
                pl.BlockSpec((H, ti_eff), lambda i, j: (0, j)),   # up-weight slab
                pl.BlockSpec((ti_eff, H), lambda i, j: (j, 0)),   # down-weight slab
            ],
            out_specs=pl.BlockSpec((tm_eff, H), lambda i, j: (i, 0)),
            scratch_shapes=[pltpu.VMEM((tm_eff, H), jnp.float32)],
        ),
        compiler_params=pltpu.CompilerParams(
            dimension_semantics=("parallel", "arbitrary")),
        cost_estimate=cost,
    )(x2d, w_up_t, w_down_t)

    if Mp != M:
        out = out[:M]
    return out.reshape(B, S, H)


def prepare_weights(w_up, w_down):
    """Transpose torch nn.Linear weights ONCE (outside the jitted hot path).

    w_up:   (I, H) torch layout  ->  (H, I)
    w_down: (H, I) torch layout  ->  (I, H)
    """
    return w_up.T, w_down.T


def init_params(key, hidden_dim, intermediate_dim, init_std=None, factor=1.0):
    """Truncated-normal init mirroring reset_parameters() (torch weight layout)."""
    k_up, k_down = jax.random.split(key)
    in_std = init_std or hidden_dim ** (-0.5)
    out_std = (init_std or intermediate_dim ** (-0.5)) / factor
    # torch nn.Linear weight layout: (out_features, in_features)
    w_up = in_std * jax.random.truncated_normal(
        k_up, -3.0, 3.0, (intermediate_dim, hidden_dim), jnp.float32)
    w_down = out_std * jax.random.truncated_normal(
        k_down, -3.0, 3.0, (hidden_dim, intermediate_dim), jnp.float32)
    return w_up, w_down


def _reference(x, w_up, w_down):
    h = jnp.einsum("bsh,ih->bsi", x, w_up)
    h = h * jax.nn.sigmoid(h)
    return jnp.einsum("bsi,hi->bsh", h, w_down)


if __name__ == "__main__":
    B, S, H, I = 2, 8, 32, 128
    key = jax.random.PRNGKey(0)
    k_x, k_w = jax.random.split(key)

    x = jax.random.normal(k_x, (B, S, H), jnp.float32)
    w_up, w_down = init_params(k_w, H, I)

    # One-time weight layout preparation (hoisted out of the per-call path).
    w_up_t, w_down_t = prepare_weights(w_up, w_down)

    out = point_wise_projection(x, w_up_t, w_down_t)
    out = jax.block_until_ready(out)

    ref = _reference(x, w_up, w_down)
    assert out.shape == (B, S, H)
    assert jnp.allclose(out, ref, atol=1e-4, rtol=1e-4), "mismatch vs reference"
    print("KERNEL_OK")
</pallas_src>

<mosaic_0001>
module attributes {stable_mosaic.version = 11 : i64} {
  func.func @_pwp_kernel(%arg0: i32, %arg1: i32, %arg2: memref<16x32xf32, #tpu.memory_space<vmem>>, %arg3: memref<32x128xf32, #tpu.memory_space<vmem>>, %arg4: memref<128x32xf32, #tpu.memory_space<vmem>>, %arg5: memref<16x32xf32, #tpu.memory_space<vmem>>, %arg6: memref<16x32xf32, #tpu.memory_space<vmem>>) attributes {dimension_semantics = [#tpu.dimension_semantics<parallel>, #tpu.dimension_semantics<arbitrary>], iteration_bounds = array<i64: 1, 1>, scalar_prefetch = 0 : i64, scratch_operands = 1 : i64, tpu.core_type = #tpu.core_type<tc>, window_params = [{transform_indices = @transform_0, window_bounds = array<i64: 16, 32>}, {transform_indices = @transform_1, window_bounds = array<i64: 32, 128>}, {transform_indices = @transform_2, window_bounds = array<i64: 128, 32>}, {transform_indices = @transform_3, window_bounds = array<i64: 16, 32>}]} {
    %c0_i32 = arith.constant 0 : i32
    %0 = arith.cmpi eq, %arg1, %c0_i32 : i32
    %1 = arith.extui %0 : i1 to i32
    %c0_i32_0 = arith.constant 0 : i32
    %2 = arith.cmpi ne, %1, %c0_i32_0 : i32
    scf.if %2 {
      %cst_14 = arith.constant 0.000000e+00 : f32
      %20 = vector.broadcast %cst_14 : f32 to vector<16x32xf32>
      %c0_15 = arith.constant 0 : index
      %c0_16 = arith.constant 0 : index
      %21 = vector.load %arg6[%c0_15, %c0_16] : memref<16x32xf32, #tpu.memory_space<vmem>>, vector<16x32xf32>
      tpu.vector_store %arg6[%c0_15, %c0_16], %20 {strides = array<i32>} : memref<16x32xf32, #tpu.memory_space<vmem>>, vector<16x32xf32>,
    } else {
    }
    %c0 = arith.constant 0 : index
    %c0_1 = arith.constant 0 : index
    %3 = vector.load %arg2[%c0, %c0_1] : memref<16x32xf32, #tpu.memory_space<vmem>>, vector<16x32xf32>
    %c0_2 = arith.constant 0 : index
    %c0_3 = arith.constant 0 : index
    %4 = vector.load %arg3[%c0_2, %c0_3] : memref<32x128xf32, #tpu.memory_space<vmem>>, vector<32x128xf32>
    %cst = arith.constant dense<0.000000e+00> : vector<16x128xf32>
    %5 = tpu.matmul %3, %4, %cst {dimension_numbers = #tpu.dot_dimension_numbers<[1], [0], [0], [1], [0, 0, 1, 1], [], []>} : vector<16x32xf32>, vector<32x128xf32>, vector<16x128xf32> -> vector<16x128xf32>
    %6 = arith.negf %5 : vector<16x128xf32>
    %7 = math.exp %6 : vector<16x128xf32>
    %cst_4 = arith.constant 1.000000e+00 : f32
    %8 = vector.broadcast %cst_4 : f32 to vector<16x128xf32>
    %9 = arith.addf %8, %7 : vector<16x128xf32>
    %10 = arith.divf %8, %9 : vector<16x128xf32>
    %11 = arith.mulf %5, %10 : vector<16x128xf32>
    %c0_5 = arith.constant 0 : index
    %c0_6 = arith.constant 0 : index
    %12 = vector.load %arg6[%c0_5, %c0_6] : memref<16x32xf32, #tpu.memory_space<vmem>>, vector<16x32xf32>
    %c0_7 = arith.constant 0 : index
    %c0_8 = arith.constant 0 : index
    %13 = vector.load %arg4[%c0_7, %c0_8] : memref<128x32xf32, #tpu.memory_space<vmem>>, vector<128x32xf32>
    %cst_9 = arith.constant dense<0.000000e+00> : vector<16x32xf32>
    %14 = tpu.matmul %11, %13, %cst_9 {dimension_numbers = #tpu.dot_dimension_numbers<[1], [0], [0], [1], [0, 0, 1, 1], [], []>} : vector<16x128xf32>, vector<128x32xf32>, vector<16x32xf32> -> vector<16x32xf32>
    %15 = arith.addf %12, %14 : vector<16x32xf32>
    %c0_10 = arith.constant 0 : index
    %c0_11 = arith.constant 0 : index
    %16 = vector.load %arg6[%c0_10, %c0_11] : memref<16x32xf32, #tpu.memory_space<vmem>>, vector<16x32xf32>
    tpu.vector_store %arg6[%c0_10, %c0_11], %15 {strides = array<i32>} : memref<16x32xf32, #tpu.memory_space<vmem>>, vector<16x32xf32>,
    %c0_i32_12 = arith.constant 0 : i32
    %17 = arith.cmpi eq, %arg1, %c0_i32_12 : i32
    %18 = arith.extui %17 : i1 to i32
    %c0_i32_13 = arith.constant 0 : i32
    %19 = arith.cmpi ne, %18, %c0_i32_13 : i32
    scf.if %19 {
      %c0_14 = arith.constant 0 : index
      %c0_15 = arith.constant 0 : index
      %20 = vector.load %arg6[%c0_14, %c0_15] : memref<16x32xf32, #tpu.memory_space<vmem>>, vector<16x32xf32>
      %c0_16 = arith.constant 0 : index
      %c0_17 = arith.constant 0 : index
      %21 = vector.load %arg5[%c0_16, %c0_17] : memref<16x32xf32, #tpu.memory_space<vmem>>, vector<16x32xf32>
      tpu.vector_store %arg5[%c0_16, %c0_17], %20 {strides = array<i32>} : memref<16x32xf32, #tpu.memory_space<vmem>>, vector<16x32xf32>,
    } else {
    }
    return
  }
  func.func @transform_0(%arg0: i32, %arg1: i32) -> (i32, i32) {
    %c0_i32 = arith.constant 0 : i32
    %c0_i32_0 = arith.constant 0 : i32
    return %arg0, %c0_i32 : i32, i32
  }
  func.func @transform_1(%arg0: i32, %arg1: i32) -> (i32, i32) {
    %c0_i32 = arith.constant 0 : i32
    %c0_i32_0 = arith.constant 0 : i32
    return %c0_i32, %arg1 : i32, i32
  }
  func.func @transform_2(%arg0: i32, %arg1: i32) -> (i32, i32) {
    %c0_i32 = arith.constant 0 : i32
    %c0_i32_0 = arith.constant 0 : i32
    return %arg1, %c0_i32 : i32, i32
  }
  func.func @transform_3(%arg0: i32, %arg1: i32) -> (i32, i32) {
    %c0_i32 = arith.constant 0 : i32
    %c0_i32_0 = arith.constant 0 : i32
    return %arg0, %c0_i32 : i32, i32
  }
}

</mosaic_0001>

<llo_original>
// kernel: point_wise_projection.1
$region0: #{point_wise_projection.1}
  #allocation0 [shape = 'u32[]', space=smem, size = 0x4, offset = 0x4, fixed_abs, tag = 'smem constant byte address 0x4 - core index']
  #allocation1 [shape = 'u32[144,128]{1,0:T(1,128)}', space=vmem, size = 0x12000, scoped, tag = 'internal scratch']
  #allocation2 [shape = 'f32[16,32]{1,0:T(8,128)}', space=vmem, size = 0x2000, scoped, tag = 'scratch operand']
  %s0 = inlined_call_operand.vmem [shape: f32[16,32], index: 0, kind: input, shape index: {}]
  %s1 = inlined_call_operand.vmem [shape: f32[32,128], index: 1, kind: input, shape index: {}]
  %s2 = inlined_call_operand.vmem [shape: f32[128,32], index: 2, kind: input, shape index: {}]
  %s3 = inlined_call_operand.hbm [shape: f32[16,32], index: 3, kind: output, shape index: {}]
  %s4 = sld [smem:[#allocation0]]
  $region30: #{point_wise_projection.1} parent=0
    _
  %s6 = ssub.s32 1, %s4
  %s7 = scalar_select 0, %s6, %s4
  $region1: #{point_wise_projection.1} parent=0
    #allocation3 [shape = 'u8[8192]{0}', space=vmem, size = 0x2000, scoped, tag = 'output window, operand 0, single buffered']
    #allocation4 [shape = 's32[1]{0}', space=sflag, size = 0x4, scoped, tag = 'scoped memory for point_wise_projection.1']
    %8 = vsyncpa [#allocation4], 0
    // Predicated region
    $region2: #{point_wise_projection.1} parent=1 // pred_check
      _
    $region3: #{point_wise_projection.1} parent=1 // pred_check_branch
      %10 = sbr.rel (0) target = $region5
    $region4: #{point_wise_projection.1} parent=1 // pred_region
      _
    $region5: #{point_wise_projection.1} parent=1 // pred_fallthru
      _
    // Predicated region
    $region6: #{point_wise_projection.1} parent=1 // pred_check
      _
    $region7: #{point_wise_projection.1} parent=1 // pred_check_branch
      %12 = sbr.rel (0) target = $region9
    $region8: #{point_wise_projection.1} parent=1 // pred_region
      _
    $region9: #{point_wise_projection.1} parent=1 // pred_fallthru
      _
    // Predicated region
    $region10: #{point_wise_projection.1} parent=1 // pred_check
      _
    $region11: #{point_wise_projection.1} parent=1 // pred_check_branch
      %14 = sbr.rel (0) target = $region13
    $region12: #{point_wise_projection.1} parent=1 // pred_region
      _
    $region13: #{point_wise_projection.1} parent=1 // pred_fallthru
      _
    %p15 = scmp.eq.s32.totalorder 0, 0
    // Predicated region
    $region14: #{point_wise_projection.1} parent=1 // pred_check
      %p16 = pneg %p15
    $region15: #{point_wise_projection.1} parent=1 // pred_check_branch
      %18 = sbr.rel (%p16) target = $region17
    $region16: #{point_wise_projection.1} parent=1 // pred_region
      %vm19 = vcmask 261120
      %20 = vst.msk [vmem:[#allocation2] sm:$0xff] %vm19, 0.0
      %21 = vst.msk [vmem:[#allocation2 + $0x8] sm:$0xff] %vm19, 0.0
    $region17: #{point_wise_projection.1} parent=1 // pred_fallthru
      _
    %v22 = vld [vmem:[%s0] sm:$0xff]
    %v23 = vld [vmem:[%s0 + $0x8] sm:$0xff]
    %v24 = vld [vmem:[%s1] sm:$0xff]
    %v25 = vld [vmem:[%s1 + $0x8] sm:$0xff]
    %v26 = vld [vmem:[%s1 + $0x10] sm:$0xff]
    %v27 = vld [vmem:[%s1 + $0x18] sm:$0xff]
    %vm28 = vcmask 261120
    %v30 = vsel %vm28, %v22, 0
    %v33 = vsel %vm28, %v23, 0
    %35 = vmatprep.subr.mxu0 0.0
    %36 = vmatpush1.msra.mxu0 0.0
    %37 = vmatprep.subr.mxu0 0.0
    %38 = vmatpush1.msra.mxu0 0.0
    %39 = vmatprep.subr.mxu0 0.0
    %40 = vmatpush1.msra.mxu0 0.0
    %41 = vmatprep.subr.mxu0 0.0
    %42 = vmatpush1.msra.mxu0 0.0
    %43 = vmatprep.subr.mxu0 0.0
    %44 = vmatpush1.msra.mxu0 0.0
    %45 = vmatprep.subr.mxu0 0.0
    %46 = vmatpush1.msra.mxu0 0.0
    %47 = vmatprep.subr.mxu0 0.0
    %48 = vmatpush1.msra.mxu0 0.0
    %49 = vmatprep.subr.mxu0 0.0
    %50 = vmatpush1.msra.mxu0 0.0
    %51 = vmatprep.subr.mxu0 0.0
    %52 = vmatpush1.msra.mxu0 0.0
    %53 = vmatprep.subr.mxu0 0.0
    %54 = vmatpush1.msra.mxu0 0.0
    %55 = vmatprep.subr.mxu0 0.0
    %56 = vmatpush1.msra.mxu0 0.0
    %57 = vmatprep.subr.mxu0 0.0
    %58 = vmatpush1.msra.mxu0 0.0
    %59 = vmatprep.subr.mxu0 0.0
    %60 = vmatpush1.msra.mxu0 %v27
    %61 = vmatprep.subr.mxu0 0.0
    %62 = vmatpush1.msra.mxu0 %v26
    %63 = vmatprep.subr.mxu0 0.0
    %64 = vmatpush1.msra.mxu0 %v25
    %65 = vmatprep.subr.mxu0 0.0
    %66 = vmatpush1.msra.mxu0 %v24
    %67 = vmatprep.subr.mxu0 0.0
    %68 = vmatpush2.msra.mxu0 0.0
    %69 = vmatprep.subr.mxu0 0.0
    %70 = vmatpush2.msra.mxu0 0.0
    %71 = vmatprep.subr.mxu0 0.0
    %72 = vmatpush2.msra.mxu0 0.0
    %73 = vmatprep.subr.mxu0 0.0
    %74 = vmatpush2.msra.mxu0 0.0
    %75 = vmatprep.subr.mxu0 0.0
    %76 = vmatpush2.msra.mxu0 0.0
    %77 = vmatprep.subr.mxu0 0.0
    %78 = vmatpush2.msra.mxu0 0.0
    %79 = vmatprep.subr.mxu0 0.0
    %80 = vmatpush2.msra.mxu0 0.0
    %81 = vmatprep.subr.mxu0 0.0
    %82 = vmatpush2.msra.mxu0 0.0
    %83 = vmatprep.subr.mxu0 0.0
    %84 = vmatpush2.msra.mxu0 0.0
    %85 = vmatprep.subr.mxu0 0.0
    %86 = vmatpush2.msra.mxu0 0.0
    %87 = vmatprep.subr.mxu0 0.0
    %88 = vmatpush2.msra.mxu0 0.0
    %89 = vmatprep.subr.mxu0 0.0
    %90 = vmatpush2.msra.mxu0 0.0
    %91 = vmatprep.subr.mxu0 0.0
    %92 = vmatpush2.msra.mxu0 0.0
    %93 = vmatprep.subr.mxu0 0.0
    %94 = vmatpush2.msra.mxu0 0.0
    %95 = vmatprep.subr.mxu0 0.0
    %96 = vmatpush2.msra.mxu0 0.0
    %97 = vmatprep.subr.mxu0 0.0
    %98 = vmatpush2.msra.mxu0 0.0
    %99 = vmatprep.mubr.f32.mxu0 0.0
    %100 = vmatmul.mubr.f32.gmra.mxu0 %v30
    %v101 = vpop.f32.mrf.mxu0
    %v102 = vadd.f32 0.0, %v101
    %v103 = vpop.f32.mrf.mxu0
    %104 = vmatprep.mubr.f32.mxu0 0.0
    %105 = vmatmul.mubr.f32.gmra.mxu0 %v33
    %v106 = vpop.f32.mrf.mxu0
    %v107 = vadd.f32 0.0, %v106
    %v108 = vpop.f32.mrf.mxu0
    %109 = vdwg.mxu0
    %v110 = vxor.u32 %v102, 2147483648
    %v111 = vxor.u32 %v107, 2147483648
    %v112 = vmul.f32 %v110, 1.442695
    %v113 = vpow.pop %v112
    %v114 = vmul.f32 %v111, 1.442695
    %v115 = vpow.pop %v114
    %v116 = vadd.f32 %v113, 1.0
    %v117 = vadd.f32 %v115, 1.0
    %v118 = vrcp.pop %v116
    %v119 = vmul.f32 1.0, %v118
    %v120 = vrcp.pop %v117
    %v121 = vmul.f32 1.0, %v120
    %v122 = vmul.f32 %v102, %v119
    %v123 = vmul.f32 %v107, %v121
    %v124 = vld [vmem:[#allocation2] sm:$0xff]
    %v125 = vld [vmem:[#allocation2 + $0x8] sm:$0xff]
    %v126 = vld [vmem:[%s2] sm:$0xff]
    %v127 = vld [vmem:[%s2 + $0x8] sm:$0xff]
    %v128 = vld [vmem:[%s2 + $0x10] sm:$0xff]
    %v129 = vld [vmem:[%s2 + $0x18] sm:$0xff]
    %v130 = vld [vmem:[%s2 + $0x20] sm:$0xff]
    %v131 = vld [vmem:[%s2 + $0x28] sm:$0xff]
    %v132 = vld [vmem:[%s2 + $0x30] sm:$0xff]
    %v133 = vld [vmem:[%s2 + $0x38] sm:$0xff]
    %v134 = vld [vmem:[%s2 + $0x40] sm:$0xff]
    %v135 = vld [vmem:[%s2 + $0x48] sm:$0xff]
    %v136 = vld [vmem:[%s2 + $0x50] sm:$0xff]
    %v137 = vld [vmem:[%s2 + $0x58] sm:$0xff]
    %v138 = vld [vmem:[%s2 + $0x60] sm:$0xff]
    %v139 = vld [vmem:[%s2 + $0x68] sm:$0xff]
    %v140 = vld [vmem:[%s2 + $0x70] sm:$0xff]
    %v141 = vld [vmem:[%s2 + $0x78] sm:$0xff]
    %142 = vmatprep.subr.mxu0 0.0
    %143 = vmatpush1.msra.mxu0 %v141
    %144 = vmatprep.subr.mxu0 0.0
    %145 = vmatpush1.msra.mxu0 %v140
    %146 = vmatprep.subr.mxu0 0.0
    %147 = vmatpush1.msra.mxu0 %v139
    %148 = vmatprep.subr.mxu0 0.0
    %149 = vmatpush1.msra.mxu0 %v138
    %150 = vmatprep.subr.mxu0 0.0
    %151 = vmatpush1.msra.mxu0 %v137
    %152 = vmatprep.subr.mxu0 0.0
    %153 = vmatpush1.msra.mxu0 %v136
    %154 = vmatprep.subr.mxu0 0.0
    %155 = vmatpush1.msra.mxu0 %v135
    %156 = vmatprep.subr.mxu0 0.0
    %157 = vmatpush1.msra.mxu0 %v134
    %158 = vmatprep.subr.mxu0 0.0
    %159 = vmatpush1.msra.mxu0 %v133
    %160 = vmatprep.subr.mxu0 0.0
    %161 = vmatpush1.msra.mxu0 %v132
    %162 = vmatprep.subr.mxu0 0.0
    %163 = vmatpush1.msra.mxu0 %v131
    %164 = vmatprep.subr.mxu0 0.0
    %165 = vmatpush1.msra.mxu0 %v130
    %166 = vmatprep.subr.mxu0 0.0
    %167 = vmatpush1.msra.mxu0 %v129
    %168 = vmatprep.subr.mxu0 0.0
    %169 = vmatpush1.msra.mxu0 %v128
    %170 = vmatprep.subr.mxu0 0.0
    %171 = vmatpush1.msra.mxu0 %v127
    %172 = vmatprep.subr.mxu0 0.0
    %173 = vmatpush1.msra.mxu0 %v126
    %174 = vmatprep.subr.mxu0 0.0
    %175 = vmatpush2.msra.mxu0 0.0
    %176 = vmatprep.subr.mxu0 0.0
    %177 = vmatpush2.msra.mxu0 0.0
    %178 = vmatprep.subr.mxu0 0.0
    %179 = vmatpush2.msra.mxu0 0.0
    %180 = vmatprep.subr.mxu0 0.0
    %181 = vmatpush2.msra.mxu0 0.0
    %182 = vmatprep.subr.mxu0 0.0
    %183 = vmatpush2.msra.mxu0 0.0
    %184 = vmatprep.subr.mxu0 0.0
    %185 = vmatpush2.msra.mxu0 0.0
    %186 = vmatprep.subr.mxu0 0.0
    %187 = vmatpush2.msra.mxu0 0.0
    %188 = vmatprep.subr.mxu0 0.0
    %189 = vmatpush2.msra.mxu0 0.0
    %190 = vmatprep.subr.mxu0 0.0
    %191 = vmatpush2.msra.mxu0 0.0
    %192 = vmatprep.subr.mxu0 0.0
    %193 = vmatpush2.msra.mxu0 0.0
    %194 = vmatprep.subr.mxu0 0.0
    %195 = vmatpush2.msra.mxu0 0.0
    %196 = vmatprep.subr.mxu0 0.0
    %197 = vmatpush2.msra.mxu0 0.0
    %198 = vmatprep.subr.mxu0 0.0
    %199 = vmatpush2.msra.mxu0 0.0
    %200 = vmatprep.subr.mxu0 0.0
    %201 = vmatpush2.msra.mxu0 0.0
    %202 = vmatprep.subr.mxu0 0.0
    %203 = vmatpush2.msra.mxu0 0.0
    %204 = vmatprep.subr.mxu0 0.0
    %205 = vmatpush2.msra.mxu0 0.0
    %206 = vmatprep.mubr.f32.mxu0 0.0
    %207 = vmatmul.mubr.f32.gmra.mxu0 %v122
    %v208 = vpop.f32.mrf.mxu0
    %v209 = vadd.f32 0.0, %v208
    %v210 = vpop.f32.mrf.mxu0
    %211 = vmatprep.mubr.f32.mxu0 0.0
    %212 = vmatmul.mubr.f32.gmra.mxu0 %v123
    %v213 = vpop.f32.mrf.mxu0
    %v214 = vadd.f32 0.0, %v213
    %v215 = vpop.f32.mrf.mxu0
    %216 = vdwg.mxu0
    %v217 = vadd.f32 %v124, %v209
    %v218 = vadd.f32 %v125, %v214
    %219 = vst.msk [vmem:[#allocation2] sm:$0xff] %vm28, %v217
    %220 = vst.msk [vmem:[#allocation2 + $0x8] sm:$0xff] %vm28, %v218
    // Predicated region
    $region18: #{point_wise_projection.1} parent=1 // pred_check
      %p221 = pneg %p15
    $region19: #{point_wise_projection.1} parent=1 // pred_check_branch
      %223 = sbr.rel (%p221) target = $region21
    $region20: #{point_wise_projection.1} parent=1 // pred_region
      %v224 = vld [vmem:[#allocation2] sm:$0xff]
      %v225 = vld [vmem:[#allocation2 + $0x8] sm:$0xff]
      %226 = vst.msk [vmem:[#allocation3] sm:$0xff] %vm28, %v224
      %227 = vst.msk [vmem:[#allocation3 + $0x8] sm:$0xff] %vm28, %v225
    $region21: #{point_wise_projection.1} parent=1 // pred_fallthru
      _
    // Predicated region
    $region22: #{point_wise_projection.1} parent=1 // pred_check
      _
    $region23: #{point_wise_projection.1} parent=1 // pred_check_branch
      %229 = sbr.rel (0) target = $region25
    $region24: #{point_wise_projection.1} parent=1 // pred_region
      %s231 = ssub.s32 256, 256
      %232 = vsyncadd [#allocation4], %s231
      %s233 = sshll.u32 [#allocation3], 4
      %s234 = int_to_ptr.vmem [resolvable:$true] %s233
      %239 = dma.vmem_to_hbm [thread:$0]  %s234, 256, %s3, [#allocation4], 128, 128, 8
    $region25: #{point_wise_projection.1} parent=1 // pred_fallthru
      _
    // Predicated region
    $region26: #{point_wise_projection.1} parent=1 // pred_check
      _
    $region27: #{point_wise_projection.1} parent=1 // pred_check_branch
      %241 = sbr.rel (0) target = $region29
    $region28: #{point_wise_projection.1} parent=1 // pred_region
      %242 = dma.done [#allocation4], 256
    $region29: #{point_wise_projection.1} parent=1 // pred_fallthru
      _
    %243 = vsyncpa [#allocation4], 1

</llo_original>
